<compile_context>
chip_gen: v5e
topology: v5e:2x2
jax: 0.10.0
libtpu: 0.0.40
codegen_flags: <defaults>
</compile_context>

<pallas_src>
import functools

import jax
import jax.numpy as jnp
from jax import lax
from jax.experimental import pallas as pl
from jax.experimental.pallas import tpu as pltpu


def _ls_ce_kernel(x_ref, t_ref, loss_ref, m_sc, l_sc, ws_sc, *,
                  w_nll, w_smooth, c_total, tc, mask_tail):
    # x_ref:    (TN, TC) logits chunk in VMEM (native dtype)
    # t_ref:    (TN, 1)  int32 targets
    # loss_ref: (TN, 1)  f32 per-row loss (written at last class chunk)
    # m_sc/l_sc/ws_sc: (TN, 1) f32 running max / exp-sum / weighted-sum
    j = pl.program_id(1)

    @pl.when(j == 0)
    def _init():
        m_sc[...] = jnp.full_like(m_sc, -jnp.inf)
        l_sc[...] = jnp.zeros_like(l_sc)
        ws_sc[...] = jnp.zeros_like(ws_sc)

    xn = x_ref[...]                                   # (TN, TC) native dtype
    t = t_ref[...]                                    # (TN, 1) int32
    tn_, tc_ = xn.shape

    # Global class index of each lane: (1, TC), broadcast against (TN, 1) t.
    col = lax.broadcasted_iota(jnp.int32, (1, tc_), 1) + j * tc
    is_t = col == t                                   # (TN, TC) bool

    x32 = xn.astype(jnp.float32)

    # Fused weighted reduction: sum(x*w) == (1-s)*x[t] + (s/C)*sum(x).
    w = jnp.where(is_t, w_nll + w_smooth, w_smooth)   # (TN, TC) f32

    if mask_tail:
        valid = col < c_total                         # (1, TC)
        x_for_max = jnp.where(valid, x32, -jnp.inf)
        x_for_sum = jnp.where(valid, x32, 0.0)
        chunk_max = jnp.max(x_for_max, axis=-1, keepdims=True)
    else:
        # Row max on the native dtype (exact for bf16/f32); cast only result.
        chunk_max = jnp.max(xn, axis=-1, keepdims=True).astype(jnp.float32)
        x_for_max = x32
        x_for_sum = x32

    # Online (streaming) logsumexp across class chunks.
    m_old = m_sc[...]
    m_new = jnp.maximum(m_old, chunk_max)
    p = jnp.exp(x_for_max - m_new)
    l_sc[...] = l_sc[...] * jnp.exp(m_old - m_new) + jnp.sum(p, axis=-1, keepdims=True)
    ws_sc[...] = ws_sc[...] + jnp.sum(x_for_sum * w, axis=-1, keepdims=True)
    m_sc[...] = m_new

    @pl.when(j == pl.num_programs(1) - 1)
    def _finalize():
        # loss = logsumexp(x) - (1-s)*x[t] - (s/C)*sum(x)
        loss_ref[...] = m_sc[...] + jnp.log(l_sc[...]) - ws_sc[...]


def _tpu_config():
    """Returns (working_vmem_budget_bytes, vmem_limit_bytes, num_tensorcores)."""
    try:
        kind = jax.devices()[0].device_kind.lower()
    except Exception:
        kind = ""
    if "7" in kind:          # v7x: 64 MiB VMEM per TC, 2 TCs/chip
        return 16 * 1024 * 1024, 48 * 1024 * 1024, 2
    if "v6" in kind:         # v6e: 128 MiB VMEM, 1 TC
        return 40 * 1024 * 1024, 64 * 1024 * 1024, 1
    if "v5" in kind or "v4" in kind:   # v5e/v5p/v4: 128 MiB VMEM
        return 40 * 1024 * 1024, 64 * 1024 * 1024, 1
    return 12 * 1024 * 1024, 32 * 1024 * 1024, 1      # unknown: conservative


def label_smoothing_cross_entropy(x, target, smoothing=0.1, *,
                                  max_block_rows=1024, max_class_chunk=None):
    """x: (N, C) logits (any float dtype); target: (N,) int labels. Scalar f32 loss."""
    n, c = x.shape
    itemsize = jnp.dtype(x.dtype).itemsize
    working_budget, vmem_limit, n_cores = _tpu_config()

    # Per-element VMEM cost of a tile: double-buffered native input plus
    # ~4 compiler-materialized f32 temps (f32 cast, exp, weights, products).
    per_elem = 2 * itemsize + 4 * 4

    # Class-chunk width: full C when it fits, else a 128-aligned chunk that
    # still leaves room for >= 32 rows.  Streaming logsumexp handles the rest.
    min_rows = 32
    tc_cap = max(128, (working_budget // (min_rows * per_elem)) // 128 * 128)
    if max_class_chunk is not None:
        tc_cap = min(tc_cap, max(128, (int(max_class_chunk) // 128) * 128))
    if c <= tc_cap:
        tc, n_chunks = c, 1
    else:
        tc = tc_cap
        n_chunks = pl.cdiv(c, tc)
    mask_tail = (n_chunks > 1) and (c % tc != 0)

    # Row-tile height: fill the working budget, align to 32 sublanes (covers
    # bf16 [16,128] / int8 [32,128] packing), floor at 8.
    tn = working_budget // (tc * per_elem)
    tn = max(8, min(tn, max_block_rows))
    tn = max(8, (tn // 32) * 32)
    if tn >= n:
        if n_cores > 1 and n > 8:
            # Split the (parallel) row axis so both TensorCores get work.
            half = -(-n // n_cores)
            tn = max(8, ((half + 7) // 8) * 8)
            if tn >= n:
                tn = n
        else:
            tn = n
    n_row_tiles = pl.cdiv(n, tn)

    t2d = target.astype(jnp.int32).reshape(n, 1)

    kernel = functools.partial(
        _ls_ce_kernel,
        w_nll=float(1.0 - smoothing),
        w_smooth=float(smoothing) / float(c),
        c_total=c,
        tc=tc,
        mask_tail=mask_tail,
    )

    per_row = pl.pallas_call(
        kernel,
        out_shape=jax.ShapeDtypeStruct((n, 1), jnp.float32),
        grid=(n_row_tiles, n_chunks),
        in_specs=[
            pl.BlockSpec((tn, tc), lambda i, j: (i, j)),   # logits, native dtype
            pl.BlockSpec((tn, 1), lambda i, j: (i, 0)),    # targets
        ],
        out_specs=pl.BlockSpec((tn, 1), lambda i, j: (i, 0)),
        scratch_shapes=[
            pltpu.VMEM((tn, 1), jnp.float32),   # running max
            pltpu.VMEM((tn, 1), jnp.float32),   # running exp-sum
            pltpu.VMEM((tn, 1), jnp.float32),   # running weighted sum
        ],
        compiler_params=pltpu.CompilerParams(
            dimension_semantics=("parallel", "arbitrary"),
            vmem_limit_bytes=int(vmem_limit),
        ),
        cost_estimate=pl.CostEstimate(
            flops=int(6 * n * c),
            transcendentals=int(n * c + n),
            bytes_accessed=int(n * c * itemsize + 8 * n),
        ),
    )(x, t2d)

    # Tiny second-pass mean over the N per-row losses (keeps grid parallel).
    return jnp.mean(per_row)


def _reference(x, target, smoothing=0.1):
    logp = jax.nn.log_softmax(x.astype(jnp.float32), axis=-1)
    nll = -jnp.take_along_axis(logp, target[:, None].astype(jnp.int32), axis=-1)[:, 0]
    smooth = -jnp.mean(logp, axis=-1)
    return jnp.mean((1.0 - smoothing) * nll + smoothing * smooth)


if __name__ == "__main__":
    key = jax.random.PRNGKey(0)
    k1, k2, k3, k4, k5, k6, k7, k8 = jax.random.split(key, 8)

    # 1) Small, lane-dense f32 case.
    N, C = 16, 128
    x = jax.random.normal(k1, (N, C), dtype=jnp.float32)
    t = jax.random.randint(k2, (N,), 0, C, dtype=jnp.int32)
    loss = jax.block_until_ready(label_smoothing_cross_entropy(x, t, smoothing=0.1))
    ref = _reference(x, t, smoothing=0.1)
    assert jnp.allclose(loss, ref, atol=1e-4, rtol=1e-4), (loss, ref)

    # smoothing = 0.0 (eval-mode cross entropy) on the same data.
    loss0 = jax.block_until_ready(label_smoothing_cross_entropy(x, t, smoothing=0.0))
    ref0 = _reference(x, t, smoothing=0.0)
    assert jnp.allclose(loss0, ref0, atol=1e-4, rtol=1e-4), (loss0, ref0)

    # 2) bf16 logits path (native dtype through HBM, no wrapper cast).
    N2, C2 = 32, 256
    xb = jax.random.normal(k3, (N2, C2), dtype=jnp.bfloat16)
    tb = jax.random.randint(k4, (N2,), 0, C2, dtype=jnp.int32)
    loss_b = jax.block_until_ready(label_smoothing_cross_entropy(xb, tb, smoothing=0.1))
    ref_b = _reference(xb, tb, smoothing=0.1)
    assert jnp.allclose(loss_b, ref_b, atol=1e-3, rtol=1e-3), (loss_b, ref_b)

    # 3) Class-chunked streaming-logsumexp path (C divides the chunk).
    N3, C3 = 24, 384
    xc = jax.random.normal(k5, (N3, C3), dtype=jnp.float32)
    tc_ = jax.random.randint(k6, (N3,), 0, C3, dtype=jnp.int32)
    loss_c = jax.block_until_ready(
        label_smoothing_cross_entropy(xc, tc_, smoothing=0.1, max_class_chunk=128))
    ref_c = _reference(xc, tc_, smoothing=0.1)
    assert jnp.allclose(loss_c, ref_c, atol=1e-4, rtol=1e-4), (loss_c, ref_c)

    # 4) Chunked path with ragged class tail (mask) and ragged row tail.
    N4, C4 = 20, 320
    xd = jax.random.normal(k7, (N4, C4), dtype=jnp.float32)
    td = jax.random.randint(k8, (N4,), 0, C4, dtype=jnp.int32)
    loss_d = jax.block_until_ready(
        label_smoothing_cross_entropy(xd, td, smoothing=0.1, max_class_chunk=128))
    ref_d = _reference(xd, td, smoothing=0.1)
    assert jnp.allclose(loss_d, ref_d, atol=1e-4, rtol=1e-4), (loss_d, ref_d)

    print("KERNEL_OK")
</pallas_src>

<mosaic_0001>
module attributes {stable_mosaic.version = 11 : i64} {
  func.func @_ls_ce_kernel(%arg0: i32, %arg1: i32, %arg2: memref<16x128xf32, #tpu.memory_space<vmem>>, %arg3: memref<16x1xi32, #tpu.memory_space<vmem>>, %arg4: memref<16x1xf32, #tpu.memory_space<vmem>>, %arg5: memref<16x1xf32, #tpu.memory_space<vmem>>, %arg6: memref<16x1xf32, #tpu.memory_space<vmem>>, %arg7: memref<16x1xf32, #tpu.memory_space<vmem>>) attributes {dimension_semantics = [#tpu.dimension_semantics<parallel>, #tpu.dimension_semantics<arbitrary>], iteration_bounds = array<i64: 1, 1>, scalar_prefetch = 0 : i64, scratch_operands = 3 : i64, tpu.core_type = #tpu.core_type<tc>, window_params = [{transform_indices = @transform_0, window_bounds = array<i64: 16, 128>}, {transform_indices = @transform_1, window_bounds = array<i64: 16, 1>}, {transform_indices = @transform_2, window_bounds = array<i64: 16, 1>}]} {
    %c0_i32 = arith.constant 0 : i32
    %0 = arith.cmpi eq, %arg1, %c0_i32 : i32
    %1 = arith.extui %0 : i1 to i32
    %c0_i32_0 = arith.constant 0 : i32
    %2 = arith.cmpi ne, %1, %c0_i32_0 : i32
    scf.if %2 {
      %cst_22 = arith.constant 0xFF800000 : f32
      %40 = vector.broadcast %cst_22 : f32 to vector<16x1xf32>
      %c0_23 = arith.constant 0 : index
      %c0_24 = arith.constant 0 : index
      %41 = vector.load %arg5[%c0_23, %c0_24] : memref<16x1xf32, #tpu.memory_space<vmem>>, vector<16x1xf32>
      tpu.vector_store %arg5[%c0_23, %c0_24], %40 {strides = array<i32>} : memref<16x1xf32, #tpu.memory_space<vmem>>, vector<16x1xf32>,
      %cst_25 = arith.constant 0.000000e+00 : f32
      %42 = vector.broadcast %cst_25 : f32 to vector<16x1xf32>
      %c0_26 = arith.constant 0 : index
      %c0_27 = arith.constant 0 : index
      %43 = vector.load %arg6[%c0_26, %c0_27] : memref<16x1xf32, #tpu.memory_space<vmem>>, vector<16x1xf32>
      tpu.vector_store %arg6[%c0_26, %c0_27], %42 {strides = array<i32>} : memref<16x1xf32, #tpu.memory_space<vmem>>, vector<16x1xf32>,
      %cst_28 = arith.constant 0.000000e+00 : f32
      %44 = vector.broadcast %cst_28 : f32 to vector<16x1xf32>
      %c0_29 = arith.constant 0 : index
      %c0_30 = arith.constant 0 : index
      %45 = vector.load %arg7[%c0_29, %c0_30] : memref<16x1xf32, #tpu.memory_space<vmem>>, vector<16x1xf32>
      tpu.vector_store %arg7[%c0_29, %c0_30], %44 {strides = array<i32>} : memref<16x1xf32, #tpu.memory_space<vmem>>, vector<16x1xf32>,
    } else {
    }
    %c0 = arith.constant 0 : index
    %c0_1 = arith.constant 0 : index
    %3 = vector.load %arg2[%c0, %c0_1] : memref<16x128xf32, #tpu.memory_space<vmem>>, vector<16x128xf32>
    %c0_2 = arith.constant 0 : index
    %c0_3 = arith.constant 0 : index
    %4 = vector.load %arg3[%c0_2, %c0_3] : memref<16x1xi32, #tpu.memory_space<vmem>>, vector<16x1xi32>
    %5 = tpu.iota {dimensions = array<i32: 1>} : vector<1x128xi32>
    %c128_i32 = arith.constant 128 : i32
    %6 = arith.muli %arg1, %c128_i32 : i32
    %7 = vector.broadcast %6 : i32 to vector<1x128xi32>
    %8 = arith.addi %5, %7 : vector<1x128xi32>
    %9 = vector.broadcast %8 : vector<1x128xi32> to vector<16x128xi32>
    %10 = vector.broadcast %4 : vector<16x1xi32> to vector<16x128xi32>
    %11 = arith.cmpi eq, %9, %10 : vector<16x128xi32>
    %cst = arith.constant 0.900781273 : f32
    %cst_4 = arith.constant 7.812500e-04 : f32
    %12 = vector.broadcast %cst : f32 to vector<16x128xf32>
    %13 = vector.broadcast %cst_4 : f32 to vector<16x128xf32>
    %14 = arith.select %11, %12, %13 : vector<16x128xi1>, vector<16x128xf32>
    %cst_5 = arith.constant dense<0xFF800000> : vector<16xf32>
    %15 = vector.multi_reduction <maximumf>, %3, %cst_5 [1] : vector<16x128xf32> to vector<16xf32>
    %16 = vector.shape_cast %15 : vector<16xf32> to vector<16x1xf32>
    %c0_6 = arith.constant 0 : index
    %c0_7 = arith.constant 0 : index
    %17 = vector.load %arg5[%c0_6, %c0_7] : memref<16x1xf32, #tpu.memory_space<vmem>>, vector<16x1xf32>
    %18 = arith.maximumf %17, %16 : vector<16x1xf32>
    %19 = vector.broadcast %18 : vector<16x1xf32> to vector<16x128xf32>
    %20 = arith.subf %3, %19 : vector<16x128xf32>
    %21 = math.exp %20 : vector<16x128xf32>
    %c0_8 = arith.constant 0 : index
    %c0_9 = arith.constant 0 : index
    %22 = vector.load %arg6[%c0_8, %c0_9] : memref<16x1xf32, #tpu.memory_space<vmem>>, vector<16x1xf32>
    %23 = arith.subf %17, %18 : vector<16x1xf32>
    %24 = math.exp %23 : vector<16x1xf32>
    %25 = arith.mulf %22, %24 : vector<16x1xf32>
    %cst_10 = arith.constant dense<0.000000e+00> : vector<16xf32>
    %26 = vector.multi_reduction <add>, %21, %cst_10 [1] : vector<16x128xf32> to vector<16xf32>
    %27 = vector.shape_cast %26 : vector<16xf32> to vector<16x1xf32>
    %28 = arith.addf %25, %27 : vector<16x1xf32>
    %c0_11 = arith.constant 0 : index
    %c0_12 = arith.constant 0 : index
    %29 = vector.load %arg6[%c0_11, %c0_12] : memref<16x1xf32, #tpu.memory_space<vmem>>, vector<16x1xf32>
    tpu.vector_store %arg6[%c0_11, %c0_12], %28 {strides = array<i32>} : memref<16x1xf32, #tpu.memory_space<vmem>>, vector<16x1xf32>,
    %c0_13 = arith.constant 0 : index
    %c0_14 = arith.constant 0 : index
    %30 = vector.load %arg7[%c0_13, %c0_14] : memref<16x1xf32, #tpu.memory_space<vmem>>, vector<16x1xf32>
    %31 = arith.mulf %3, %14 : vector<16x128xf32>
    %cst_15 = arith.constant dense<0.000000e+00> : vector<16xf32>
    %32 = vector.multi_reduction <add>, %31, %cst_15 [1] : vector<16x128xf32> to vector<16xf32>
    %33 = vector.shape_cast %32 : vector<16xf32> to vector<16x1xf32>
    %34 = arith.addf %30, %33 : vector<16x1xf32>
    %c0_16 = arith.constant 0 : index
    %c0_17 = arith.constant 0 : index
    %35 = vector.load %arg7[%c0_16, %c0_17] : memref<16x1xf32, #tpu.memory_space<vmem>>, vector<16x1xf32>
    tpu.vector_store %arg7[%c0_16, %c0_17], %34 {strides = array<i32>} : memref<16x1xf32, #tpu.memory_space<vmem>>, vector<16x1xf32>,
    %c0_18 = arith.constant 0 : index
    %c0_19 = arith.constant 0 : index
    %36 = vector.load %arg5[%c0_18, %c0_19] : memref<16x1xf32, #tpu.memory_space<vmem>>, vector<16x1xf32>
    tpu.vector_store %arg5[%c0_18, %c0_19], %18 {strides = array<i32>} : memref<16x1xf32, #tpu.memory_space<vmem>>, vector<16x1xf32>,
    %c0_i32_20 = arith.constant 0 : i32
    %37 = arith.cmpi eq, %arg1, %c0_i32_20 : i32
    %38 = arith.extui %37 : i1 to i32
    %c0_i32_21 = arith.constant 0 : i32
    %39 = arith.cmpi ne, %38, %c0_i32_21 : i32
    scf.if %39 {
      %c0_22 = arith.constant 0 : index
      %c0_23 = arith.constant 0 : index
      %40 = vector.load %arg5[%c0_22, %c0_23] : memref<16x1xf32, #tpu.memory_space<vmem>>, vector<16x1xf32>
      %c0_24 = arith.constant 0 : index
      %c0_25 = arith.constant 0 : index
      %41 = vector.load %arg6[%c0_24, %c0_25] : memref<16x1xf32, #tpu.memory_space<vmem>>, vector<16x1xf32>
      %42 = math.log %41 : vector<16x1xf32>
      %43 = arith.addf %40, %42 : vector<16x1xf32>
      %c0_26 = arith.constant 0 : index
      %c0_27 = arith.constant 0 : index
      %44 = vector.load %arg7[%c0_26, %c0_27] : memref<16x1xf32, #tpu.memory_space<vmem>>, vector<16x1xf32>
      %45 = arith.subf %43, %44 : vector<16x1xf32>
      %c0_28 = arith.constant 0 : index
      %c0_29 = arith.constant 0 : index
      %46 = vector.load %arg4[%c0_28, %c0_29] : memref<16x1xf32, #tpu.memory_space<vmem>>, vector<16x1xf32>
      tpu.vector_store %arg4[%c0_28, %c0_29], %45 {strides = array<i32>} : memref<16x1xf32, #tpu.memory_space<vmem>>, vector<16x1xf32>,
    } else {
    }
    return
  }
  func.func @transform_0(%arg0: i32, %arg1: i32) -> (i32, i32) {
    %c0_i32 = arith.constant 0 : i32
    return %arg0, %arg1 : i32, i32
  }
  func.func @transform_1(%arg0: i32, %arg1: i32) -> (i32, i32) {
    %c0_i32 = arith.constant 0 : i32
    %c0_i32_0 = arith.constant 0 : i32
    return %arg0, %c0_i32 : i32, i32
  }
  func.func @transform_2(%arg0: i32, %arg1: i32) -> (i32, i32) {
    %c0_i32 = arith.constant 0 : i32
    %c0_i32_0 = arith.constant 0 : i32
    return %arg0, %c0_i32 : i32, i32
  }
}

</mosaic_0001>

<llo_original>
// kernel: tpu_custom_call.1
$region0: #{tpu_custom_call.1}
  #allocation0 [shape = 'u32[]', space=smem, size = 0x4, offset = 0x4, fixed_abs, tag = 'smem constant byte address 0x4 - core index']
  #allocation1 [shape = 'u32[72,128]{1,0:T(1,128)}', space=vmem, size = 0x9000, scoped, tag = 'internal scratch']
  #allocation2 [shape = 'f32[16,1]{1,0:T(8,128)}', space=vmem, size = 0x2000, scoped, tag = 'scratch operand']
  #allocation3 [shape = 'f32[16,1]{1,0:T(8,128)}', space=vmem, size = 0x2000, scoped, tag = 'scratch operand']
  #allocation4 [shape = 'f32[16,1]{1,0:T(8,128)}', space=vmem, size = 0x2000, scoped, tag = 'scratch operand']
  %s0 = inlined_call_operand.vmem [shape: f32[16,128], index: 0, kind: input, shape index: {}]
  %s1 = inlined_call_operand.vmem [shape: s32[16,1], index: 1, kind: input, shape index: {}]
  %s2 = inlined_call_operand.vmem [shape: f32[16,1], index: 2, kind: output, shape index: {}]
  %s3 = sld [smem:[#allocation0]]
  $region26: #{tpu_custom_call.1} parent=0
    _
  %s5 = ssub.s32 1, %s3
  %s6 = scalar_select 0, %s5, %s3
  // Predicated region
  $region2: #{tpu_custom_call.1} parent=0 // pred_check
    _
  $region3: #{tpu_custom_call.1} parent=0 // pred_check_branch
    %8 = sbr.rel (0) target = $region5
  $region4: #{tpu_custom_call.1} parent=0 // pred_region
    _
  $region5: #{tpu_custom_call.1} parent=0 // pred_fallthru
    _
  // Predicated region
  $region6: #{tpu_custom_call.1} parent=0 // pred_check
    _
  $region7: #{tpu_custom_call.1} parent=0 // pred_check_branch
    %10 = sbr.rel (0) target = $region9
  $region8: #{tpu_custom_call.1} parent=0 // pred_region
    _
  $region9: #{tpu_custom_call.1} parent=0 // pred_fallthru
    _
  %p11 = scmp.eq.s32.totalorder 0, 0
  // Predicated region
  $region10: #{tpu_custom_call.1} parent=0 // pred_check
    %p12 = pneg %p11
  $region11: #{tpu_custom_call.1} parent=0 // pred_check_branch
    %14 = sbr.rel (%p12) target = $region13
  $region12: #{tpu_custom_call.1} parent=0 // pred_region
    %vm15 = vcmask 7168
    %16 = vst.msk [vmem:[#allocation2] sm:$0xff] %vm15, -inf
    %17 = vst.msk [vmem:[#allocation2 + $0x8] sm:$0xff] %vm15, -inf
    %18 = vst.msk [vmem:[#allocation3] sm:$0xff] %vm15, 0.0
    %19 = vst.msk [vmem:[#allocation3 + $0x8] sm:$0xff] %vm15, 0.0
    %20 = vst.msk [vmem:[#allocation4] sm:$0xff] %vm15, 0.0
    %21 = vst.msk [vmem:[#allocation4 + $0x8] sm:$0xff] %vm15, 0.0
  $region13: #{tpu_custom_call.1} parent=0 // pred_fallthru
    _
  %v22 = vld [vmem:[%s0] sm:$0xff]
  %v23 = vld [vmem:[%s0 + $0x8] sm:$0xff]
  %v24 = vld [vmem:[%s1] sm:$0xff]
  %v25 = vld [vmem:[%s1 + $0x8] sm:$0xff]
  %v26 = vlaneseq
  %v27 = vand.u32 %v26, 127
  %s28 = smul.u32 0, 128
  %v29 = vstv %s28
  %v30 = vadd.s32 %v27, %v29
  %31 = vset.pattern.permute.xlu0 0
  %32 = vperm.xlu0 %31, %v24
  %v33 = vpop.permute.xlu0 %32
  %34 = vset.pattern.permute.xlu0 0
  %35 = vperm.xlu0 %34, %v25
  %v36 = vpop.permute.xlu0 %35
  %vm37 = vcmp.eq.s32.totalorder %v30, %v33
  %vm38 = vcmp.eq.s32.totalorder %v30, %v36
  %v39 = vsel %vm37, 0.9007813, 0.00078125
  %v40 = vsel %vm38, 0.9007813, 0.00078125
  %41 = vmax.xlane.f32.xlu0 %v22
  %v42 = vpop.xlane.xlu0 %41
  %43 = vmax.xlane.f32.xlu0 %v23
  %v44 = vpop.xlane.xlu0 %43
  %v45 = vld [vmem:[#allocation2] sm:$0xff]
  %v46 = vld [vmem:[#allocation2 + $0x8] sm:$0xff]
  %v47 = vmax.f32 %v45, %v42
  %v48 = vmax.f32 %v46, %v44
  %50 = vset.pattern.permute.xlu0 0
  %51 = vperm.xlu0 %50, %v47
  %v52 = vpop.permute.xlu0 %51
  %55 = vset.pattern.permute.xlu0 0
  %56 = vperm.xlu0 %55, %v48
  %v57 = vpop.permute.xlu0 %56
  %v59 = vsub.f32 %v22, %v52
  %v60 = vsub.f32 %v23, %v57
  %v61 = vmul.f32 %v59, 1.442695
  %v62 = vpow.pop %v61
  %v63 = vmul.f32 %v60, 1.442695
  %v64 = vpow.pop %v63
  %v65 = vld [vmem:[#allocation3] sm:$0xff]
  %v66 = vld [vmem:[#allocation3 + $0x8] sm:$0xff]
  %v67 = vsub.f32 %v45, %v47
  %v68 = vsub.f32 %v46, %v48
  %v69 = vmul.f32 %v67, 1.442695
  %v70 = vpow.pop %v69
  %v71 = vmul.f32 %v68, 1.442695
  %v72 = vpow.pop %v71
  %v73 = vmul.f32 %v65, %v70
  %v74 = vmul.f32 %v66, %v72
  %75 = vadd.xlane.f32.xlu0 %v62
  %v76 = vpop.xlane.xlu0 %75
  %77 = vadd.xlane.f32.xlu0 %v64
  %v78 = vpop.xlane.xlu0 %77
  %v79 = vadd.f32 %v73, %v76
  %v80 = vadd.f32 %v74, %v78
  %vm81 = vcmask 7168
  %82 = vst.msk [vmem:[#allocation3] sm:$0xff] %vm81, %v79
  %83 = vst.msk [vmem:[#allocation3 + $0x8] sm:$0xff] %vm81, %v80
  %v84 = vld [vmem:[#allocation4] sm:$0xff]
  %v85 = vld [vmem:[#allocation4 + $0x8] sm:$0xff]
  %v86 = vmul.f32 %v22, %v39
  %v87 = vmul.f32 %v23, %v40
  %88 = vadd.xlane.f32.xlu0 %v86
  %v89 = vpop.xlane.xlu0 %88
  %90 = vadd.xlane.f32.xlu0 %v87
  %v91 = vpop.xlane.xlu0 %90
  %v92 = vadd.f32 %v84, %v89
  %v93 = vadd.f32 %v85, %v91
  %94 = vst.msk [vmem:[#allocation4] sm:$0xff] %vm81, %v92
  %95 = vst.msk [vmem:[#allocation4 + $0x8] sm:$0xff] %vm81, %v93
  %96 = vst.msk [vmem:[#allocation2] sm:$0xff] %vm81, %v47
  %97 = vst.msk [vmem:[#allocation2 + $0x8] sm:$0xff] %vm81, %v48
  // Predicated region
  $region14: #{tpu_custom_call.1} parent=0 // pred_check
    %p98 = pneg %p11
  $region15: #{tpu_custom_call.1} parent=0 // pred_check_branch
    %100 = sbr.rel (%p98) target = $region17
  $region16: #{tpu_custom_call.1} parent=0 // pred_region
    %v101 = vld [vmem:[#allocation2] sm:$0xff]
    %v102 = vld [vmem:[#allocation2 + $0x8] sm:$0xff]
    %v103 = vld [vmem:[#allocation3] sm:$0xff]
    %v104 = vld [vmem:[#allocation3 + $0x8] sm:$0xff]
    %v105 = vlog2.pop %v103
    %v106 = vmul.f32 %v105, 0.6931472
    %v107 = vlog2.pop %v104
    %v108 = vmul.f32 %v107, 0.6931472
    %v109 = vadd.f32 %v101, %v106
    %v110 = vadd.f32 %v102, %v108
    %v111 = vld [vmem:[#allocation4] sm:$0xff]
    %v112 = vld [vmem:[#allocation4 + $0x8] sm:$0xff]
    %v113 = vsub.f32 %v109, %v111
    %v114 = vsub.f32 %v110, %v112
    %115 = vst.msk [vmem:[%s2] sm:$0xff] %vm81, %v113
    %116 = vst.msk [vmem:[%s2 + $0x8] sm:$0xff] %vm81, %v114
  $region17: #{tpu_custom_call.1} parent=0 // pred_fallthru
    _
  // Predicated region
  $region18: #{tpu_custom_call.1} parent=0 // pred_check
    _
  $region19: #{tpu_custom_call.1} parent=0 // pred_check_branch
    %118 = sbr.rel (0) target = $region21
  $region20: #{tpu_custom_call.1} parent=0 // pred_region
    _
  $region21: #{tpu_custom_call.1} parent=0 // pred_fallthru
    _
  // Predicated region
  $region22: #{tpu_custom_call.1} parent=0 // pred_check
    _
  $region23: #{tpu_custom_call.1} parent=0 // pred_check_branch
    %120 = sbr.rel (0) target = $region25
  $region24: #{tpu_custom_call.1} parent=0 // pred_region
    _
  $region25: #{tpu_custom_call.1} parent=0 // pred_fallthru
    _

</llo_original>
